<compile_context>
chip_gen: v5e
topology: v5e:2x2
jax: 0.10.0
libtpu: 0.0.40
codegen_flags: <defaults>
</compile_context>

<pallas_src>
import jax
import jax.numpy as jnp
from jax import lax
from jax.experimental import pallas as pl
from jax.experimental.pallas import tpu as pltpu


def bin_kernel(x_ref, ta_ref, tb_ref, fa_ref, fb_ref, o_ref):
    # x_ref:  (Bt, F, T) VMEM
    # ta_ref: (F, 1) = tw * temporal_scale,  tb_ref: (F, 1) = tw * temporal_bias
    # fa_ref: (1, T) = fw * feature_scale,   fb_ref: (1, T) = fw * feature_bias
    x = x_ref[...].astype(jnp.float32)                  # (Bt, F, T)
    _, F, T = x.shape
    xsq = x * x                                         # shared by both reductions

    # ---- temporal stats: over time axis (axis=2), unbiased (ddof=1) ----
    t_sum = jnp.sum(x, axis=2, keepdims=True)           # (Bt, F, 1)
    t_ssq = jnp.sum(xsq, axis=2, keepdims=True)         # (Bt, F, 1)
    t_mean = t_sum * (1.0 / T)
    t_var = (t_ssq - t_sum * t_mean) * (1.0 / (T - 1))
    t_inv = jnp.where(jnp.isnan(t_var) | (t_var < 1e-8), 1.0, lax.rsqrt(t_var))

    # ---- feature stats: over feature axis (axis=1), unbiased (ddof=1) ----
    f_sum = jnp.sum(x, axis=1, keepdims=True)           # (Bt, 1, T)
    f_ssq = jnp.sum(xsq, axis=1, keepdims=True)         # (Bt, 1, T)
    f_mean = f_sum * (1.0 / F)
    f_var = (f_ssq - f_sum * f_mean) * (1.0 / (F - 1))
    f_inv = jnp.where(jnp.isnan(f_var) | (f_var < 1e-8), 1.0, lax.rsqrt(f_var))

    ta = ta_ref[...][None, :, :]                        # (1, F, 1)
    tb = tb_ref[...][None, :, :]                        # (1, F, 1)
    fa = fa_ref[...][None, :, :]                        # (1, 1, T)
    fb = fb_ref[...][None, :, :]                        # (1, 1, T)

    t_scale = ta * t_inv                                # (Bt, F, 1)
    f_scale = fa * f_inv                                # (Bt, 1, T)

    # o = tw*(ts*t_norm + tb) + fw*(fs*f_norm + fb), fully fused.
    out = t_scale * (x - t_mean) + f_scale * (x - f_mean) + (tb + fb)
    o_ref[...] = out.astype(o_ref.dtype)


def bin_forward(x, params, *, target_block_bytes=2 * 1024 * 1024):
    B, F, T = x.shape

    # Reproduce the "reset negative weight to 0.01" branch from forward().
    fw = jnp.where(params["feature_weight"][0] < 0, 0.01,
                   params["feature_weight"][0]).astype(jnp.float32)
    tw = jnp.where(params["temporal_weight"][0] < 0, 0.01,
                   params["temporal_weight"][0]).astype(jnp.float32)

    # Fold blend weights into the tiny parameter arrays (O(F+T) wrapper work,
    # removes two full-slab multiplies from the kernel).
    ta = (tw * params["temporal_scale"].reshape(F, 1)).astype(jnp.float32)   # (F, 1)
    tb = (tw * params["temporal_bias"].reshape(F, 1)).astype(jnp.float32)    # (F, 1)
    fa = (fw * params["feature_scale"].reshape(1, T)).astype(jnp.float32)    # (1, T)
    fb = (fw * params["feature_bias"].reshape(1, T)).astype(jnp.float32)     # (1, T)

    # --- block several batch elements per grid step (~1-2 MiB f32 per block) ---
    slab_bytes = F * T * 4
    bt = max(1, min(B, target_block_bytes // max(slab_bytes, 1)))
    # Prefer a bt that divides B so the last block isn't padded.
    for cand in range(bt, 0, -1):
        if B % cand == 0:
            bt = cand
            break
    grid = (pl.cdiv(B, bt),)

    # VMEM budget: ~2x in + 2x out (x dtype) + f32 temporaries. Keep it well
    # under 32 MiB scoped so the same config is safe on v7x (64 MiB physical).
    block_f32_bytes = bt * F * T * 4
    vmem_limit = int(max(4 * 2**20, min(32 * 2**20, 16 * block_f32_bytes)))

    itemsize = jnp.dtype(x.dtype).itemsize
    cost = pl.CostEstimate(
        flops=10 * B * F * T,
        transcendentals=B * (F + T),
        bytes_accessed=2 * B * F * T * itemsize,
    )

    # TODO(synk): if production T < 128 the lane axis is under-filled; a
    # (B, T, F) layout (or packing batches along the last dim) would give
    # lane-dense loads/stores, but that changes the caller-visible layout.
    return pl.pallas_call(
        bin_kernel,
        out_shape=jax.ShapeDtypeStruct((B, F, T), x.dtype),
        grid=grid,
        in_specs=[
            pl.BlockSpec((bt, F, T), lambda b: (b, 0, 0)),   # x
            pl.BlockSpec((F, 1), lambda b: (0, 0)),          # tw * temporal_scale
            pl.BlockSpec((F, 1), lambda b: (0, 0)),          # tw * temporal_bias
            pl.BlockSpec((1, T), lambda b: (0, 0)),          # fw * feature_scale
            pl.BlockSpec((1, T), lambda b: (0, 0)),          # fw * feature_bias
        ],
        out_specs=pl.BlockSpec((bt, F, T), lambda b: (b, 0, 0)),
        compiler_params=pltpu.CompilerParams(
            dimension_semantics=("parallel",),
            vmem_limit_bytes=vmem_limit,
        ),
        cost_estimate=cost,
    )(x, ta, tb, fa, fb)


def bin_reference(x, params):
    """Pure-JAX reference matching the PyTorch forward pass."""
    B, F, T = x.shape
    fw = jnp.where(params["feature_weight"][0] < 0, 0.01, params["feature_weight"][0])
    tw = jnp.where(params["temporal_weight"][0] < 0, 0.01, params["temporal_weight"][0])

    # temporal
    t_mean = jnp.mean(x, axis=2, keepdims=True)
    t_std = jnp.std(x, axis=2, keepdims=True, ddof=1)
    t_std = jnp.where(jnp.isnan(t_std) | (t_std < 1e-4), 1.0, t_std)
    t_norm = (x - t_mean) / t_std
    t_out = params["temporal_scale"].reshape(1, F, 1) * t_norm + \
        params["temporal_bias"].reshape(1, F, 1)

    # feature
    f_mean = jnp.mean(x, axis=1, keepdims=True)
    f_std = jnp.std(x, axis=1, keepdims=True, ddof=1)
    f_std = jnp.where(jnp.isnan(f_std) | (f_std < 1e-4), 1.0, f_std)
    f_norm = (x - f_mean) / f_std
    f_out = params["feature_scale"].reshape(1, 1, T) * f_norm + \
        params["feature_bias"].reshape(1, 1, T)

    return fw * f_out + tw * t_out


if __name__ == "__main__":
    B, F, T = 2, 8, 16  # batch, num_features, seq_length

    key = jax.random.PRNGKey(0)
    k_fs, k_ts, k_x = jax.random.split(key, 3)

    # Deterministic parameter init mirroring the PyTorch __init__:
    #   biases -> 0, scales -> xavier_normal (std = sqrt(2/(fan_in+fan_out))),
    #   feature_weight = temporal_weight = 0.5.
    params = {
        "feature_bias": jnp.zeros((T, 1), jnp.float32),
        "feature_scale": jax.random.normal(k_fs, (T, 1), jnp.float32)
        * jnp.sqrt(2.0 / (1 + T)),
        "temporal_bias": jnp.zeros((F, 1), jnp.float32),
        "temporal_scale": jax.random.normal(k_ts, (F, 1), jnp.float32)
        * jnp.sqrt(2.0 / (1 + F)),
        "feature_weight": jnp.array([0.5], jnp.float32),
        "temporal_weight": jnp.array([0.5], jnp.float32),
    }

    x = jax.random.normal(k_x, (B, F, T), dtype=jnp.float32)

    out = bin_forward(x, params)
    out = jax.block_until_ready(out)

    ref = bin_reference(x, params)
    assert out.shape == (B, F, T)
    assert jnp.allclose(out, ref, atol=1e-5, rtol=1e-5)

    print("KERNEL_OK")
</pallas_src>

<mosaic_0001>
module attributes {stable_mosaic.version = 11 : i64} {
  func.func @bin_kernel(%arg0: i32, %arg1: memref<2x8x16xf32, #tpu.memory_space<vmem>>, %arg2: memref<8x1xf32, #tpu.memory_space<vmem>>, %arg3: memref<8x1xf32, #tpu.memory_space<vmem>>, %arg4: memref<1x16xf32, #tpu.memory_space<vmem>>, %arg5: memref<1x16xf32, #tpu.memory_space<vmem>>, %arg6: memref<2x8x16xf32, #tpu.memory_space<vmem>>) attributes {dimension_semantics = [#tpu.dimension_semantics<parallel>], iteration_bounds = array<i64: 1>, scalar_prefetch = 0 : i64, scratch_operands = 0 : i64, tpu.core_type = #tpu.core_type<tc>, window_params = [{transform_indices = @transform_0, window_bounds = array<i64: 2, 8, 16>}, {pipeline_mode = #tpu.pipeline_mode<synchronous>, transform_indices = @transform_1, window_bounds = array<i64: 8, 1>}, {pipeline_mode = #tpu.pipeline_mode<synchronous>, transform_indices = @transform_2, window_bounds = array<i64: 8, 1>}, {pipeline_mode = #tpu.pipeline_mode<synchronous>, transform_indices = @transform_3, window_bounds = array<i64: 1, 16>}, {pipeline_mode = #tpu.pipeline_mode<synchronous>, transform_indices = @transform_4, window_bounds = array<i64: 1, 16>}, {transform_indices = @transform_5, window_bounds = array<i64: 2, 8, 16>}]} {
    %c0 = arith.constant 0 : index
    %c0_0 = arith.constant 0 : index
    %c0_1 = arith.constant 0 : index
    %0 = vector.load %arg1[%c0, %c0_0, %c0_1] : memref<2x8x16xf32, #tpu.memory_space<vmem>>, vector<2x8x16xf32>
    %1 = arith.mulf %0, %0 : vector<2x8x16xf32>
    %cst = arith.constant dense<0.000000e+00> : vector<2x8xf32>
    %2 = vector.multi_reduction <add>, %0, %cst [2] : vector<2x8x16xf32> to vector<2x8xf32>
    %3 = vector.shape_cast %2 : vector<2x8xf32> to vector<2x8x1xf32>
    %cst_2 = arith.constant dense<0.000000e+00> : vector<2x8xf32>
    %4 = vector.multi_reduction <add>, %1, %cst_2 [2] : vector<2x8x16xf32> to vector<2x8xf32>
    %5 = vector.shape_cast %4 : vector<2x8xf32> to vector<2x8x1xf32>
    %cst_3 = arith.constant 6.250000e-02 : f32
    %6 = vector.broadcast %cst_3 : f32 to vector<2x8x1xf32>
    %7 = arith.mulf %3, %6 : vector<2x8x1xf32>
    %8 = arith.mulf %3, %7 : vector<2x8x1xf32>
    %9 = arith.subf %5, %8 : vector<2x8x1xf32>
    %cst_4 = arith.constant 0.0666666701 : f32
    %10 = vector.broadcast %cst_4 : f32 to vector<2x8x1xf32>
    %11 = arith.mulf %9, %10 : vector<2x8x1xf32>
    %12 = arith.cmpf one, %11, %11 : vector<2x8x1xf32>
    %cst_5 = arith.constant 9.99999993E-9 : f32
    %13 = vector.broadcast %cst_5 : f32 to vector<2x8x1xf32>
    %14 = arith.cmpf olt, %11, %13 : vector<2x8x1xf32>
    %15 = arith.ori %12, %14 : vector<2x8x1xi1>
    %16 = math.rsqrt %11 : vector<2x8x1xf32>
    %cst_6 = arith.constant 1.000000e+00 : f32
    %17 = vector.broadcast %cst_6 : f32 to vector<2x8x1xf32>
    %18 = arith.select %15, %17, %16 : vector<2x8x1xi1>, vector<2x8x1xf32>
    %cst_7 = arith.constant dense<0.000000e+00> : vector<2x16xf32>
    %19 = vector.multi_reduction <add>, %0, %cst_7 [1] : vector<2x8x16xf32> to vector<2x16xf32>
    %20 = vector.shape_cast %19 : vector<2x16xf32> to vector<2x1x16xf32>
    %cst_8 = arith.constant dense<0.000000e+00> : vector<2x16xf32>
    %21 = vector.multi_reduction <add>, %1, %cst_8 [1] : vector<2x8x16xf32> to vector<2x16xf32>
    %22 = vector.shape_cast %21 : vector<2x16xf32> to vector<2x1x16xf32>
    %cst_9 = arith.constant 1.250000e-01 : f32
    %23 = vector.broadcast %cst_9 : f32 to vector<2x1x16xf32>
    %24 = arith.mulf %20, %23 : vector<2x1x16xf32>
    %25 = arith.mulf %20, %24 : vector<2x1x16xf32>
    %26 = arith.subf %22, %25 : vector<2x1x16xf32>
    %cst_10 = arith.constant 0.142857149 : f32
    %27 = vector.broadcast %cst_10 : f32 to vector<2x1x16xf32>
    %28 = arith.mulf %26, %27 : vector<2x1x16xf32>
    %29 = arith.cmpf one, %28, %28 : vector<2x1x16xf32>
    %cst_11 = arith.constant 9.99999993E-9 : f32
    %30 = vector.broadcast %cst_11 : f32 to vector<2x1x16xf32>
    %31 = arith.cmpf olt, %28, %30 : vector<2x1x16xf32>
    %32 = arith.ori %29, %31 : vector<2x1x16xi1>
    %33 = math.rsqrt %28 : vector<2x1x16xf32>
    %cst_12 = arith.constant 1.000000e+00 : f32
    %34 = vector.broadcast %cst_12 : f32 to vector<2x1x16xf32>
    %35 = arith.select %32, %34, %33 : vector<2x1x16xi1>, vector<2x1x16xf32>
    %c0_13 = arith.constant 0 : index
    %c0_14 = arith.constant 0 : index
    %36 = vector.load %arg2[%c0_13, %c0_14] : memref<8x1xf32, #tpu.memory_space<vmem>>, vector<8x1xf32>
    %37 = vector.shape_cast %36 : vector<8x1xf32> to vector<1x8x1xf32>
    %c0_15 = arith.constant 0 : index
    %c0_16 = arith.constant 0 : index
    %38 = vector.load %arg3[%c0_15, %c0_16] : memref<8x1xf32, #tpu.memory_space<vmem>>, vector<8x1xf32>
    %39 = vector.shape_cast %38 : vector<8x1xf32> to vector<1x8x1xf32>
    %c0_17 = arith.constant 0 : index
    %c0_18 = arith.constant 0 : index
    %40 = vector.load %arg4[%c0_17, %c0_18] : memref<1x16xf32, #tpu.memory_space<vmem>>, vector<1x16xf32>
    %41 = vector.shape_cast %40 : vector<1x16xf32> to vector<1x1x16xf32>
    %c0_19 = arith.constant 0 : index
    %c0_20 = arith.constant 0 : index
    %42 = vector.load %arg5[%c0_19, %c0_20] : memref<1x16xf32, #tpu.memory_space<vmem>>, vector<1x16xf32>
    %43 = vector.shape_cast %42 : vector<1x16xf32> to vector<1x1x16xf32>
    %44 = vector.broadcast %37 : vector<1x8x1xf32> to vector<2x8x1xf32>
    %45 = arith.mulf %44, %18 : vector<2x8x1xf32>
    %46 = vector.broadcast %41 : vector<1x1x16xf32> to vector<2x1x16xf32>
    %47 = arith.mulf %46, %35 : vector<2x1x16xf32>
    %48 = vector.broadcast %7 : vector<2x8x1xf32> to vector<2x8x16xf32>
    %49 = arith.subf %0, %48 : vector<2x8x16xf32>
    %50 = vector.broadcast %45 : vector<2x8x1xf32> to vector<2x8x16xf32>
    %51 = arith.mulf %50, %49 : vector<2x8x16xf32>
    %52 = vector.broadcast %24 : vector<2x1x16xf32> to vector<2x8x16xf32>
    %53 = arith.subf %0, %52 : vector<2x8x16xf32>
    %54 = vector.broadcast %47 : vector<2x1x16xf32> to vector<2x8x16xf32>
    %55 = arith.mulf %54, %53 : vector<2x8x16xf32>
    %56 = arith.addf %51, %55 : vector<2x8x16xf32>
    %57 = vector.broadcast %39 : vector<1x8x1xf32> to vector<1x8x16xf32>
    %58 = vector.broadcast %43 : vector<1x1x16xf32> to vector<1x8x16xf32>
    %59 = arith.addf %57, %58 : vector<1x8x16xf32>
    %60 = vector.broadcast %59 : vector<1x8x16xf32> to vector<2x8x16xf32>
    %61 = arith.addf %56, %60 : vector<2x8x16xf32>
    %c0_21 = arith.constant 0 : index
    %c0_22 = arith.constant 0 : index
    %c0_23 = arith.constant 0 : index
    %62 = vector.load %arg6[%c0_21, %c0_22, %c0_23] : memref<2x8x16xf32, #tpu.memory_space<vmem>>, vector<2x8x16xf32>
    tpu.vector_store %arg6[%c0_21, %c0_22, %c0_23], %61 {strides = array<i32>} : memref<2x8x16xf32, #tpu.memory_space<vmem>>, vector<2x8x16xf32>,
    return
  }
  func.func @transform_0(%arg0: i32) -> (i32, i32, i32) {
    %c0_i32 = arith.constant 0 : i32
    %c0_i32_0 = arith.constant 0 : i32
    %c0_i32_1 = arith.constant 0 : i32
    return %arg0, %c0_i32, %c0_i32_0 : i32, i32, i32
  }
  func.func @transform_1(%arg0: i32) -> (i32, i32) {
    %c0_i32 = arith.constant 0 : i32
    %c0_i32_0 = arith.constant 0 : i32
    %c0_i32_1 = arith.constant 0 : i32
    return %c0_i32, %c0_i32_0 : i32, i32
  }
  func.func @transform_2(%arg0: i32) -> (i32, i32) {
    %c0_i32 = arith.constant 0 : i32
    %c0_i32_0 = arith.constant 0 : i32
    %c0_i32_1 = arith.constant 0 : i32
    return %c0_i32, %c0_i32_0 : i32, i32
  }
  func.func @transform_3(%arg0: i32) -> (i32, i32) {
    %c0_i32 = arith.constant 0 : i32
    %c0_i32_0 = arith.constant 0 : i32
    %c0_i32_1 = arith.constant 0 : i32
    return %c0_i32, %c0_i32_0 : i32, i32
  }
  func.func @transform_4(%arg0: i32) -> (i32, i32) {
    %c0_i32 = arith.constant 0 : i32
    %c0_i32_0 = arith.constant 0 : i32
    %c0_i32_1 = arith.constant 0 : i32
    return %c0_i32, %c0_i32_0 : i32, i32
  }
  func.func @transform_5(%arg0: i32) -> (i32, i32, i32) {
    %c0_i32 = arith.constant 0 : i32
    %c0_i32_0 = arith.constant 0 : i32
    %c0_i32_1 = arith.constant 0 : i32
    return %arg0, %c0_i32, %c0_i32_0 : i32, i32, i32
  }
}

</mosaic_0001>

<llo_original>
// kernel: tpu_custom_call.1
$region0: #{tpu_custom_call.1}
  #allocation0 [shape = 'u32[]', space=smem, size = 0x4, offset = 0x4, fixed_abs, tag = 'smem constant byte address 0x4 - core index']
  #allocation1 [shape = 'u32[72,128]{1,0:T(1,128)}', space=vmem, size = 0x9000, scoped, tag = 'internal scratch']
  %s0 = inlined_call_operand.vmem [shape: f32[2,8,16], index: 0, kind: input, shape index: {}]
  %s1 = inlined_call_operand.vmem [shape: f32[8,1], index: 1, kind: input, shape index: {}]
  %s2 = inlined_call_operand.vmem [shape: f32[8,1], index: 2, kind: input, shape index: {}]
  %s3 = inlined_call_operand.vmem [shape: f32[1,16], index: 3, kind: input, shape index: {}]
  %s4 = inlined_call_operand.vmem [shape: f32[1,16], index: 4, kind: input, shape index: {}]
  %s5 = inlined_call_operand.hbm [shape: f32[2,8,16], index: 5, kind: output, shape index: {}]
  %s6 = sld [smem:[#allocation0]]
  $region30: #{tpu_custom_call.1} parent=0
    _
  %s8 = ssub.s32 1, %s6
  %s9 = scalar_select 0, %s8, %s6
  $region1: #{tpu_custom_call.1} parent=0
    #allocation2 [shape = 'u8[8192]{0}', space=vmem, size = 0x2000, scoped, tag = 'output window, operand 0, single buffered']
    #allocation3 [shape = 's32[1]{0}', space=sflag, size = 0x4, scoped, tag = 'scoped memory for tpu_custom_call.1']
    %10 = vsyncpa [#allocation3], 0
    // Predicated region
    $region2: #{tpu_custom_call.1} parent=1 // pred_check
      _
    $region3: #{tpu_custom_call.1} parent=1 // pred_check_branch
      %12 = sbr.rel (0) target = $region5
    $region4: #{tpu_custom_call.1} parent=1 // pred_region
      _
    $region5: #{tpu_custom_call.1} parent=1 // pred_fallthru
      _
    // Predicated region
    $region6: #{tpu_custom_call.1} parent=1 // pred_check
      _
    $region7: #{tpu_custom_call.1} parent=1 // pred_check_branch
      %14 = sbr.rel (0) target = $region9
    $region8: #{tpu_custom_call.1} parent=1 // pred_region
      _
    $region9: #{tpu_custom_call.1} parent=1 // pred_fallthru
      _
    // Predicated region
    $region10: #{tpu_custom_call.1} parent=1 // pred_check
      _
    $region11: #{tpu_custom_call.1} parent=1 // pred_check_branch
      %16 = sbr.rel (0) target = $region13
    $region12: #{tpu_custom_call.1} parent=1 // pred_region
      _
    $region13: #{tpu_custom_call.1} parent=1 // pred_fallthru
      _
    // Predicated region
    $region14: #{tpu_custom_call.1} parent=1 // pred_check
      _
    $region15: #{tpu_custom_call.1} parent=1 // pred_check_branch
      %18 = sbr.rel (0) target = $region17
    $region16: #{tpu_custom_call.1} parent=1 // pred_region
      _
    $region17: #{tpu_custom_call.1} parent=1 // pred_fallthru
      _
    // Predicated region
    $region18: #{tpu_custom_call.1} parent=1 // pred_check
      _
    $region19: #{tpu_custom_call.1} parent=1 // pred_check_branch
      %20 = sbr.rel (0) target = $region21
    $region20: #{tpu_custom_call.1} parent=1 // pred_region
      _
    $region21: #{tpu_custom_call.1} parent=1 // pred_fallthru
      _
    %v21 = vld [vmem:[%s0] sm:$0xff]
    %v22 = vld [vmem:[%s0 + $0x8] sm:$0xff]
    %v23 = vmul.f32 %v21, %v21
    %v24 = vmul.f32 %v22, %v22
    %vm25 = vcmask 130048
    %v26 = vsel %vm25, %v21, 0.0
    %27 = vadd.xlane.f32.xlu0 %v26
    %v28 = vpop.xlane.xlu0 %27
    %v29 = vsel %vm25, %v22, 0.0
    %30 = vadd.xlane.f32.xlu0 %v29
    %v31 = vpop.xlane.xlu0 %30
    %v32 = vsel %vm25, %v23, 0.0
    %33 = vadd.xlane.f32.xlu0 %v32
    %v34 = vpop.xlane.xlu0 %33
    %v35 = vsel %vm25, %v24, 0.0
    %36 = vadd.xlane.f32.xlu0 %v35
    %v37 = vpop.xlane.xlu0 %36
    %v38 = vmul.f32 %v28, 0.0625
    %v39 = vmul.f32 %v31, 0.0625
    %v40 = vmul.f32 %v28, %v38
    %v41 = vmul.f32 %v31, %v39
    %v42 = vsub.f32 %v34, %v40
    %v43 = vsub.f32 %v37, %v41
    %v44 = vmul.f32 %v42, 0.06666667
    %v45 = vmul.f32 %v43, 0.06666667
    %vm46 = vcmp.ne.f32.partialorder %v44, %v44
    %vm47 = vcmp.ne.f32.partialorder %v45, %v45
    %vm48 = vcmp.lt.f32.partialorder %v44, 1e-08
    %vm49 = vcmp.lt.f32.partialorder %v45, 1e-08
    %vm50 = vmor %vm46, %vm48
    %vm51 = vmor %vm47, %vm49
    %v52 = vrsqrt.pop %v44
    %v53 = vmul.f32 %v52, %v44
    %v54 = vmul.f32 %v53, %v52
    %v55 = vmul.f32 0.5, %v54
    %v56 = vsub.f32 1.5, %v55
    %v57 = vmul.f32 %v52, %v56
    %vm58 = vweird.f32 %v44
    %vm59 = vweird.f32 %v52
    %vm60 = vmor %vm58, %vm59
    %v61 = vsel %vm60, %v52, %v57
    %v62 = vrsqrt.pop %v45
    %v63 = vmul.f32 %v62, %v45
    %v64 = vmul.f32 %v63, %v62
    %v65 = vmul.f32 0.5, %v64
    %v66 = vsub.f32 1.5, %v65
    %v67 = vmul.f32 %v62, %v66
    %vm68 = vweird.f32 %v45
    %vm69 = vweird.f32 %v62
    %vm70 = vmor %vm68, %vm69
    %v71 = vsel %vm70, %v62, %v67
    %v72 = vsel %vm50, 1.0, %v61
    %v73 = vsel %vm51, 1.0, %v71
    %v74 = vrot.slane %v26, 4
    %v75 = vadd.f32 %v26, %v74
    %v76 = vrot.slane %v75, 2
    %v77 = vadd.f32 %v75, %v76
    %v78 = vrot.slane %v77, 1
    %v79 = vadd.f32 %v77, %v78
    %v80 = vrot.slane %v29, 4
    %v81 = vadd.f32 %v29, %v80
    %v82 = vrot.slane %v81, 2
    %v83 = vadd.f32 %v81, %v82
    %v84 = vrot.slane %v83, 1
    %v85 = vadd.f32 %v83, %v84
    %v86 = vrot.slane %v32, 4
    %v87 = vadd.f32 %v32, %v86
    %v88 = vrot.slane %v87, 2
    %v89 = vadd.f32 %v87, %v88
    %v90 = vrot.slane %v89, 1
    %v91 = vadd.f32 %v89, %v90
    %v92 = vrot.slane %v35, 4
    %v93 = vadd.f32 %v35, %v92
    %v94 = vrot.slane %v93, 2
    %v95 = vadd.f32 %v93, %v94
    %v96 = vrot.slane %v95, 1
    %v97 = vadd.f32 %v95, %v96
    %v98 = vmul.f32 %v79, 0.125
    %v99 = vmul.f32 %v85, 0.125
    %v100 = vmul.f32 %v79, %v98
    %v101 = vmul.f32 %v85, %v99
    %v102 = vsub.f32 %v91, %v100
    %v103 = vsub.f32 %v97, %v101
    %v104 = vmul.f32 %v102, 0.14285715
    %v105 = vmul.f32 %v103, 0.14285715
    %vm106 = vcmp.ne.f32.partialorder %v104, %v104
    %vm107 = vcmp.ne.f32.partialorder %v105, %v105
    %vm108 = vcmp.lt.f32.partialorder %v104, 1e-08
    %vm109 = vcmp.lt.f32.partialorder %v105, 1e-08
    %vm110 = vmor %vm106, %vm108
    %vm111 = vmor %vm107, %vm109
    %v112 = vrsqrt.pop %v104
    %v113 = vmul.f32 %v112, %v104
    %v114 = vmul.f32 %v113, %v112
    %v115 = vmul.f32 0.5, %v114
    %v116 = vsub.f32 1.5, %v115
    %v117 = vmul.f32 %v112, %v116
    %vm118 = vweird.f32 %v104
    %vm119 = vweird.f32 %v112
    %vm120 = vmor %vm118, %vm119
    %v121 = vsel %vm120, %v112, %v117
    %v122 = vrsqrt.pop %v105
    %v123 = vmul.f32 %v122, %v105
    %v124 = vmul.f32 %v123, %v122
    %v125 = vmul.f32 0.5, %v124
    %v126 = vsub.f32 1.5, %v125
    %v127 = vmul.f32 %v122, %v126
    %vm128 = vweird.f32 %v105
    %vm129 = vweird.f32 %v122
    %vm130 = vmor %vm128, %vm129
    %v131 = vsel %vm130, %v122, %v127
    %v132 = vsel %vm110, 1.0, %v121
    %v133 = vsel %vm111, 1.0, %v131
    %v134 = vld [vmem:[%s1] sm:$0xff]
    %v135 = vld [vmem:[%s2] sm:$0xff]
    %v136 = vld [vmem:[%s3] sm:$0x1]
    %v137 = vld [vmem:[%s4] sm:$0x1]
    %v138 = vmul.f32 %v134, %v72
    %v139 = vmul.f32 %v134, %v73
    %v140 = vmul.f32 %v136, %v132
    %v141 = vmul.f32 %v136, %v133
    %v142 = vsub.f32 %v21, %v38
    %v143 = vsub.f32 %v22, %v39
    %145 = vset.pattern.permute.xlu0 0
    %146 = vperm.xlu0 %145, %v138
    %v147 = vpop.permute.xlu0 %146
    %150 = vset.pattern.permute.xlu0 0
    %151 = vperm.xlu0 %150, %v139
    %v152 = vpop.permute.xlu0 %151
    %v154 = vmul.f32 %v147, %v142
    %v155 = vmul.f32 %v152, %v143
    %v156 = vsub.f32 %v21, %v98
    %v157 = vsub.f32 %v22, %v99
    %v160 = vperm.slane %v140, 0
    %v161 = vperm.slane %v141, 0
    %v164 = vmul.f32 %v160, %v156
    %v165 = vmul.f32 %v161, %v157
    %v166 = vadd.f32 %v154, %v164
    %v167 = vadd.f32 %v155, %v165
    %169 = vset.pattern.permute.xlu0 0
    %170 = vperm.xlu0 %169, %v135
    %v171 = vpop.permute.xlu0 %170
    %v174 = vperm.slane %v137, 0
    %v176 = vadd.f32 %v171, %v174
    %v177 = vadd.f32 %v166, %v176
    %v178 = vadd.f32 %v167, %v176
    %179 = vst.msk [vmem:[#allocation2] sm:$0xff] %vm25, %v177
    %180 = vst.msk [vmem:[#allocation2 + $0x8] sm:$0xff] %vm25, %v178
    // Predicated region
    $region22: #{tpu_custom_call.1} parent=1 // pred_check
      _
    $region23: #{tpu_custom_call.1} parent=1 // pred_check_branch
      %182 = sbr.rel (0) target = $region25
    $region24: #{tpu_custom_call.1} parent=1 // pred_region
      %184 = vsyncadd [#allocation3], 0
      %s185 = sshll.u32 [#allocation2], 4
      %s186 = int_to_ptr.vmem [resolvable:$true] %s185
      %s187 = sshll.u32 %s5, 4
      %s188 = int_to_ptr.hbm [resolvable:$true] %s187
      %193 = dma.vmem_to_hbm [thread:$0]  %s186, 256, %s188, [#allocation3], 128, 128, 8
    $region25: #{tpu_custom_call.1} parent=1 // pred_fallthru
      _
    // Predicated region
    $region26: #{tpu_custom_call.1} parent=1 // pred_check
      _
    $region27: #{tpu_custom_call.1} parent=1 // pred_check_branch
      %195 = sbr.rel (0) target = $region29
    $region28: #{tpu_custom_call.1} parent=1 // pred_region
      %197 = dma.done [#allocation3], 256
    $region29: #{tpu_custom_call.1} parent=1 // pred_fallthru
      _
    %198 = vsyncpa [#allocation3], 1

</llo_original>
